<compile_context>
chip_gen: v7x
topology: tpu7x:2x2x1
jax: 0.10.0
libtpu: 0.0.40
codegen_flags: <defaults>
</compile_context>

<pallas_src>
import functools

import jax
import jax.numpy as jnp
from jax.experimental import pallas as pl
from jax.experimental.pallas import tpu as pltpu


def _ce_kernel(x_ref, tgt_ref, loss_ref, nll_ref, *, token_tile, vocab_size,
               epsilon, padding_idx):
    i = pl.program_id(0)
    row0 = pl.multiple_of(i * token_tile, token_tile)

    x = x_ref[...].astype(jnp.float32)                 # (TT, V)
    tgt = tgt_ref[pl.ds(row0, token_tile), :]          # (TT, 1) int32

    # log-softmax pieces (numerically stable)
    max_x = jnp.max(x, axis=-1, keepdims=True)                       # (TT, 1)
    shifted = x - max_x                                              # (TT, V)
    sum_exp = jnp.sum(jnp.exp(shifted), axis=-1, keepdims=True)      # (TT, 1)
    sum_logit = jnp.sum(shifted, axis=-1, keepdims=True)             # (TT, 1)
    log_sum_exp = jnp.log(sum_exp)                                   # (TT, 1)

    # gather target logit via one-hot mask (no dynamic lane gather on TPU)
    vocab_ids = jax.lax.broadcasted_iota(jnp.int32, shifted.shape, 1)
    tgt_logit = jnp.sum(jnp.where(vocab_ids == tgt, shifted, 0.0),
                        axis=-1, keepdims=True)                      # (TT, 1)

    nll = log_sum_exp - tgt_logit                                    # (TT, 1)
    smooth = vocab_size * log_sum_exp - sum_logit                    # (TT, 1)
    eps_i = epsilon / (vocab_size - 1)
    tok_loss = (1.0 - epsilon - eps_i) * nll + eps_i * smooth

    valid = tgt != padding_idx
    nll = jnp.where(valid, nll, 0.0)
    tok_loss = jnp.where(valid, tok_loss, 0.0)

    # Per-tile partial sums; broadcast-fill the lane-dense (8,128) output
    # block so stores are unmasked full vst's. Wrapper reads [::8, 0].
    loss_p = jnp.sum(tok_loss, axis=(0, 1), keepdims=True)           # (1, 1)
    nll_p = jnp.sum(nll, axis=(0, 1), keepdims=True)                 # (1, 1)
    loss_ref[...] = jnp.broadcast_to(loss_p, loss_ref.shape)
    nll_ref[...] = jnp.broadcast_to(nll_p, nll_ref.shape)


def _pick_token_tile(n_tok, vocab, target_block_bytes=2 << 20):
    """Rows per tile so the f32 logits block is ~target_block_bytes."""
    rows = max(8, target_block_bytes // (vocab * 4))
    rows = min(rows, 1024)
    n_pad8 = ((n_tok + 7) // 8) * 8
    rows = min(rows, n_pad8)
    rows = max(8, (rows // 8) * 8)
    return int(rows)


def ls_cross_entropy_forward(inputs, targets, *, epsilon, padding_idx,
                             max_batch_tokens, token_tile=None):
    """Forward pass of LSCrossEntropyLayer.

    inputs:  [bs, sl, vocab] float logits (f32 or bf16; cast to f32 in-kernel)
    targets: [bs, sl] integer targets
    returns: (reduced_loss, nll_loss) each float32 of shape (1,)
    """
    bs, sl, vocab = inputs.shape
    n_tok = bs * sl
    if n_tok > max_batch_tokens:
        raise ValueError(
            f"Batch token numbers {n_tok} exceeds the limit {max_batch_tokens}.")

    if token_tile is None:
        token_tile = _pick_token_tile(n_tok, vocab)
    token_tile = max(8, (int(token_tile) // 8) * 8)

    n_tiles = (n_tok + token_tile - 1) // token_tile
    n_pad = n_tiles * token_tile

    x = inputs.reshape(n_tok, vocab)
    tgt = targets.reshape(n_tok, 1).astype(jnp.int32)
    if n_pad != n_tok:
        # Pad ragged token counts; padded rows carry padding_idx targets so
        # the in-kernel mask zeroes their contribution.
        x = jnp.pad(x, ((0, n_pad - n_tok), (0, 0)))
        tgt = jnp.pad(tgt, ((0, n_pad - n_tok), (0, 0)),
                      constant_values=int(padding_idx))

    kernel = functools.partial(
        _ce_kernel, token_tile=token_tile, vocab_size=vocab,
        epsilon=float(epsilon), padding_idx=int(padding_idx))

    # Explicit scoped VMEM: enough for double-buffered input blocks + f32
    # temporaries, capped at 48 MiB (fits v7x's 64 MiB physical VMEM).
    block_f32 = token_tile * vocab * 4
    vmem_limit = int(min(48 << 20, max(32 << 20, 8 * block_f32 + (2 << 20))))

    loss_p, nll_p = pl.pallas_call(
        kernel,
        out_shape=(jax.ShapeDtypeStruct((n_tiles * 8, 128), jnp.float32),
                   jax.ShapeDtypeStruct((n_tiles * 8, 128), jnp.float32)),
        grid_spec=pltpu.PrefetchScalarGridSpec(
            num_scalar_prefetch=0,
            grid=(n_tiles,),
            in_specs=[
                # Streaming logits tiles, auto double-buffered.
                pl.BlockSpec((token_tile, vocab), lambda i: (i, 0)),
                # Whole target array resident in VMEM once (no per-step DMA).
                pl.BlockSpec(memory_space=pltpu.MemorySpace.VMEM),
            ],
            out_specs=[
                pl.BlockSpec((8, 128), lambda i: (i, 0)),
                pl.BlockSpec((8, 128), lambda i: (i, 0)),
            ],
        ),
        compiler_params=pltpu.CompilerParams(
            dimension_semantics=("parallel",),
            vmem_limit_bytes=vmem_limit),
    )(x, tgt)

    # Tiny cross-tile reduction in the wrapper (each tile's partial is
    # replicated across its (8,128) block; row 8*i, lane 0 holds tile i).
    loss = jnp.sum(loss_p[::8, 0]).reshape(1)
    nll = jnp.sum(nll_p[::8, 0]).reshape(1)
    return loss, nll


def _reference(inputs, targets, epsilon, padding_idx):
    x = inputs.astype(jnp.float32)
    bs, sl, vocab = x.shape
    lprobs = jax.nn.log_softmax(x, axis=-1).reshape(-1, vocab)
    tgt = targets.reshape(-1)
    nll = -jnp.take_along_axis(lprobs, tgt[:, None], axis=-1)[:, 0]
    smooth = -jnp.sum(lprobs, axis=-1)
    eps_i = epsilon / (vocab - 1)
    loss = (1.0 - epsilon - eps_i) * nll + eps_i * smooth
    valid = tgt != padding_idx
    return (jnp.sum(jnp.where(valid, loss, 0.0)).reshape(1),
            jnp.sum(jnp.where(valid, nll, 0.0)).reshape(1))


if __name__ == "__main__":
    # config (from LSCrossEntropyLayer.get_config)
    max_batch_tokens = 1024
    padding_idx = 0
    epsilon = 0.1

    bs, sl, vocab = 2, 8, 128
    key = jax.random.PRNGKey(0)
    k_in, k_tgt = jax.random.split(key)
    inputs = jax.random.normal(k_in, (bs, sl, vocab), dtype=jnp.float32)
    targets = jax.random.randint(k_tgt, (bs, sl), 0, vocab, dtype=jnp.int32)
    # force a couple of padding tokens to exercise the padding_idx mask
    targets = targets.at[0, 0].set(padding_idx).at[1, 3].set(padding_idx)

    loss, nll_loss = ls_cross_entropy_forward(
        inputs, targets, epsilon=epsilon, padding_idx=padding_idx,
        max_batch_tokens=max_batch_tokens)
    jax.block_until_ready((loss, nll_loss))

    ref_loss, ref_nll = _reference(inputs, targets, epsilon, padding_idx)
    assert jnp.allclose(loss, ref_loss, rtol=1e-5, atol=1e-4), (loss, ref_loss)
    assert jnp.allclose(nll_loss, ref_nll, rtol=1e-5, atol=1e-4), (nll_loss, ref_nll)

    print("KERNEL_OK")
</pallas_src>

<mosaic_0001>
module attributes {stable_mosaic.version = 11 : i64} {
  func.func @_ce_kernel(%arg0: i32, %arg1: memref<16x128xf32, #tpu.memory_space<vmem>>, %arg2: memref<16x1xi32, #tpu.memory_space<vmem>>, %arg3: memref<8x128xf32, #tpu.memory_space<vmem>>, %arg4: memref<8x128xf32, #tpu.memory_space<vmem>>) attributes {dimension_semantics = [#tpu.dimension_semantics<parallel>], iteration_bounds = array<i64: 1>, scalar_prefetch = 0 : i64, scratch_operands = 0 : i64, tpu.core_type = #tpu.core_type<tc>, window_params = [{transform_indices = @transform_0, window_bounds = array<i64: 16, 128>}, {pipeline_mode = #tpu.pipeline_mode<synchronous>, transform_indices = @transform_1, window_bounds = array<i64: 16, 1>}, {transform_indices = @transform_2, window_bounds = array<i64: 8, 128>}, {transform_indices = @transform_3, window_bounds = array<i64: 8, 128>}]} {
    %c16_i32 = arith.constant 16 : i32
    %0 = arith.muli %arg0, %c16_i32 : i32
    %1 = tpu.assume_multiple %0, 16 : i32
    %c0 = arith.constant 0 : index
    %c0_0 = arith.constant 0 : index
    %2 = vector.load %arg1[%c0, %c0_0] : memref<16x128xf32, #tpu.memory_space<vmem>>, vector<16x128xf32>
    %3 = arith.index_cast %1 : i32 to index
    %c0_1 = arith.constant 0 : index
    %4 = vector.load %arg2[%3, %c0_1] : memref<16x1xi32, #tpu.memory_space<vmem>>, vector<16x1xi32>
    %cst = arith.constant dense<0xFF800000> : vector<16xf32>
    %5 = vector.multi_reduction <maximumf>, %2, %cst [1] : vector<16x128xf32> to vector<16xf32>
    %6 = vector.shape_cast %5 : vector<16xf32> to vector<16x1xf32>
    %7 = vector.broadcast %6 : vector<16x1xf32> to vector<16x128xf32>
    %8 = arith.subf %2, %7 : vector<16x128xf32>
    %9 = math.exp %8 : vector<16x128xf32>
    %cst_2 = arith.constant dense<0.000000e+00> : vector<16xf32>
    %10 = vector.multi_reduction <add>, %9, %cst_2 [1] : vector<16x128xf32> to vector<16xf32>
    %11 = vector.shape_cast %10 : vector<16xf32> to vector<16x1xf32>
    %cst_3 = arith.constant dense<0.000000e+00> : vector<16xf32>
    %12 = vector.multi_reduction <add>, %8, %cst_3 [1] : vector<16x128xf32> to vector<16xf32>
    %13 = vector.shape_cast %12 : vector<16xf32> to vector<16x1xf32>
    %14 = math.log %11 : vector<16x1xf32>
    %15 = tpu.iota {dimensions = array<i32: 1>} : vector<16x128xi32>
    %16 = vector.broadcast %4 : vector<16x1xi32> to vector<16x128xi32>
    %17 = arith.cmpi eq, %15, %16 : vector<16x128xi32>
    %cst_4 = arith.constant 0.000000e+00 : f32
    %18 = vector.broadcast %cst_4 : f32 to vector<16x128xf32>
    %19 = arith.select %17, %8, %18 : vector<16x128xi1>, vector<16x128xf32>
    %cst_5 = arith.constant dense<0.000000e+00> : vector<16xf32>
    %20 = vector.multi_reduction <add>, %19, %cst_5 [1] : vector<16x128xf32> to vector<16xf32>
    %21 = vector.shape_cast %20 : vector<16xf32> to vector<16x1xf32>
    %22 = arith.subf %14, %21 : vector<16x1xf32>
    %cst_6 = arith.constant 1.280000e+02 : f32
    %23 = vector.broadcast %cst_6 : f32 to vector<16x1xf32>
    %24 = arith.mulf %23, %14 : vector<16x1xf32>
    %25 = arith.subf %24, %13 : vector<16x1xf32>
    %cst_7 = arith.constant 0.899212599 : f32
    %26 = vector.broadcast %cst_7 : f32 to vector<16x1xf32>
    %27 = arith.mulf %26, %22 : vector<16x1xf32>
    %cst_8 = arith.constant 7.87401571E-4 : f32
    %28 = vector.broadcast %cst_8 : f32 to vector<16x1xf32>
    %29 = arith.mulf %28, %25 : vector<16x1xf32>
    %30 = arith.addf %27, %29 : vector<16x1xf32>
    %c0_i32 = arith.constant 0 : i32
    %31 = vector.broadcast %c0_i32 : i32 to vector<16x1xi32>
    %32 = arith.cmpi ne, %4, %31 : vector<16x1xi32>
    %cst_9 = arith.constant 0.000000e+00 : f32
    %33 = vector.broadcast %cst_9 : f32 to vector<16x1xf32>
    %34 = arith.select %32, %22, %33 : vector<16x1xi1>, vector<16x1xf32>
    %cst_10 = arith.constant 0.000000e+00 : f32
    %35 = vector.broadcast %cst_10 : f32 to vector<16x1xf32>
    %36 = arith.select %32, %30, %35 : vector<16x1xi1>, vector<16x1xf32>
    %37 = vector.shape_cast %36 : vector<16x1xf32> to vector<1x16x1xf32>
    %cst_11 = arith.constant dense<0.000000e+00> : vector<1xf32>
    %38 = vector.multi_reduction <add>, %37, %cst_11 [1, 2] : vector<1x16x1xf32> to vector<1xf32>
    %39 = vector.shape_cast %38 : vector<1xf32> to vector<1x1x1xf32>
    %40 = vector.extract %39[0, 0, 0] : f32 from vector<1x1x1xf32>
    %41 = vector.broadcast %40 : f32 to vector<1x1xf32>
    %42 = vector.shape_cast %34 : vector<16x1xf32> to vector<1x16x1xf32>
    %cst_12 = arith.constant dense<0.000000e+00> : vector<1xf32>
    %43 = vector.multi_reduction <add>, %42, %cst_12 [1, 2] : vector<1x16x1xf32> to vector<1xf32>
    %44 = vector.shape_cast %43 : vector<1xf32> to vector<1x1x1xf32>
    %45 = vector.extract %44[0, 0, 0] : f32 from vector<1x1x1xf32>
    %46 = vector.broadcast %45 : f32 to vector<1x1xf32>
    %47 = vector.shape_cast %41 : vector<1x1xf32> to vector<1x1xf32>
    %48 = vector.broadcast %47 : vector<1x1xf32> to vector<8x128xf32>
    %c0_13 = arith.constant 0 : index
    %c0_14 = arith.constant 0 : index
    %49 = vector.load %arg3[%c0_13, %c0_14] : memref<8x128xf32, #tpu.memory_space<vmem>>, vector<8x128xf32>
    tpu.vector_store %arg3[%c0_13, %c0_14], %48 {strides = array<i32>} : memref<8x128xf32, #tpu.memory_space<vmem>>, vector<8x128xf32>,
    %50 = vector.shape_cast %46 : vector<1x1xf32> to vector<1x1xf32>
    %51 = vector.broadcast %50 : vector<1x1xf32> to vector<8x128xf32>
    %c0_15 = arith.constant 0 : index
    %c0_16 = arith.constant 0 : index
    %52 = vector.load %arg4[%c0_15, %c0_16] : memref<8x128xf32, #tpu.memory_space<vmem>>, vector<8x128xf32>
    tpu.vector_store %arg4[%c0_15, %c0_16], %51 {strides = array<i32>} : memref<8x128xf32, #tpu.memory_space<vmem>>, vector<8x128xf32>,
    return
  }
  func.func @transform_0(%arg0: i32) -> (i32, i32) {
    %c0_i32 = arith.constant 0 : i32
    %c0_i32_0 = arith.constant 0 : i32
    return %arg0, %c0_i32 : i32, i32
  }
  func.func @transform_1(%arg0: i32) -> (i32, i32) {
    %c0_i32 = arith.constant 0 : i32
    %c0_i32_0 = arith.constant 0 : i32
    %c0_i32_1 = arith.constant 0 : i32
    return %c0_i32, %c0_i32_0 : i32, i32
  }
  func.func @transform_2(%arg0: i32) -> (i32, i32) {
    %c0_i32 = arith.constant 0 : i32
    %c0_i32_0 = arith.constant 0 : i32
    return %arg0, %c0_i32 : i32, i32
  }
  func.func @transform_3(%arg0: i32) -> (i32, i32) {
    %c0_i32 = arith.constant 0 : i32
    %c0_i32_0 = arith.constant 0 : i32
    return %arg0, %c0_i32 : i32, i32
  }
}

</mosaic_0001>

<llo_original>
// kernel: tpu_custom_call.1
$region0: #{tpu_custom_call.1}
  #allocation0 [shape = 'u32[]', space=smem, size = 0x4, offset = 0x4, fixed_abs, tag = 'smem constant byte address 0x4 - core index']
  #allocation1 [shape = 'u32[144,128]{1,0:T(1,128)}', space=vmem, size = 0x12000, scoped, tag = 'internal scratch']
  %s0 = inlined_call_operand.vmem [shape: f32[16,128], index: 0, kind: input, shape index: {}]
  %s1 = inlined_call_operand.vmem [shape: s32[16,1], index: 1, kind: input, shape index: {}]
  %s2 = inlined_call_operand.hbm [shape: f32[8,128], index: 2, kind: output, shape index: {0}]
  %s3 = inlined_call_operand.hbm [shape: f32[8,128], index: 3, kind: output, shape index: {1}]
  %4 = xla_tuple %s2, %s3
  %s5 = sld [smem:[#allocation0]]
  $region26: #{tpu_custom_call.1} parent=0
    _
  %s7 = ssub.s32 1, %s5
  %s8 = scalar_select 0, %s7, %s5
  $region1: #{tpu_custom_call.1} parent=0
    #allocation2 [shape = 'u8[4096]{0}', space=vmem, size = 0x1000, scoped, tag = 'output window, operand 0, single buffered']
    #allocation3 [shape = 's32[1]{0}', space=sflag, size = 0x4, scoped, tag = 'scoped memory for tpu_custom_call.1']
    #allocation4 [shape = 'u8[4096]{0}', space=vmem, size = 0x1000, scoped, tag = 'output window, operand 1, single buffered']
    #allocation5 [shape = 's32[1]{0}', space=sflag, size = 0x4, scoped, tag = 'scoped memory for tpu_custom_call.1']
    %9 = vsyncpa [#allocation3], 0
    %10 = vsyncpa [#allocation5], 0
    // Predicated region
    $region2: #{tpu_custom_call.1} parent=1 // pred_check
      _
    $region3: #{tpu_custom_call.1} parent=1 // pred_check_branch
      %12 = sbr.rel (0) target = $region5
    $region4: #{tpu_custom_call.1} parent=1 // pred_region
      _
    $region5: #{tpu_custom_call.1} parent=1 // pred_fallthru
      _
    // Predicated region
    $region6: #{tpu_custom_call.1} parent=1 // pred_check
      _
    $region7: #{tpu_custom_call.1} parent=1 // pred_check_branch
      %14 = sbr.rel (0) target = $region9
    $region8: #{tpu_custom_call.1} parent=1 // pred_region
      _
    $region9: #{tpu_custom_call.1} parent=1 // pred_fallthru
      _
    %s15 = smul.u32 0, 16
    %v16 = vld [vmem:[%s0] sm:$0xff]
    %v17 = vld [vmem:[%s0 + $0x8] sm:$0xff]
    %s18 = scalar_lea.vmem %s1, %s15
    %v19 = vld [vmem:[%s18] sm:$0xff]
    %v20 = vld [vmem:[%s18 + $0x8] sm:$0xff]
    %21 = vmax.xlane.f32.xlu0 %v16
    %v22 = vpop.xlane.xlu0 %21
    %23 = vmax.xlane.f32.xlu0 %v17
    %v24 = vpop.xlane.xlu0 %23
    %v25 = vsub.f32 %v16, %v22
    %v26 = vsub.f32 %v17, %v24
    %v27 = vmul.f32 %v25, 1.442695
    %v28 = vpow.pop %v27
    %v29 = vmul.f32 %v26, 1.442695
    %v30 = vpow.pop %v29
    %31 = vadd.xlane.f32.xlu0 %v28
    %v32 = vpop.xlane.xlu0 %31
    %33 = vadd.xlane.f32.xlu0 %v30
    %v34 = vpop.xlane.xlu0 %33
    %35 = vadd.xlane.f32.xlu0 %v25
    %v36 = vpop.xlane.xlu0 %35
    %37 = vadd.xlane.f32.xlu0 %v26
    %v38 = vpop.xlane.xlu0 %37
    %v39 = vlog2.pop %v32
    %v40 = vmul.f32 %v39, 0.6931472
    %v41 = vlog2.pop %v34
    %v42 = vmul.f32 %v41, 0.6931472
    %v43 = vlaneseq
    %v44 = vand.u32 %v43, 127
    %45 = vset.pattern.permute.xlu0 0
    %46 = vperm.xlu0 %45, %v19
    %v47 = vpop.permute.xlu0 %46
    %48 = vset.pattern.permute.xlu0 0
    %49 = vperm.xlu0 %48, %v20
    %v50 = vpop.permute.xlu0 %49
    %vm51 = vcmp.eq.s32.totalorder %v44, %v47
    %vm52 = vcmp.eq.s32.totalorder %v44, %v50
    %v53 = vsel %vm51, %v25, 0.0
    %v54 = vsel %vm52, %v26, 0.0
    %55 = vadd.xlane.f32.xlu0 %v53
    %v56 = vpop.xlane.xlu0 %55
    %57 = vadd.xlane.f32.xlu0 %v54
    %v58 = vpop.xlane.xlu0 %57
    %v59 = vsub.f32 %v40, %v56
    %v60 = vsub.f32 %v42, %v58
    %v61 = vmul.f32 %v40, 128.0
    %v62 = vmul.f32 %v42, 128.0
    %v63 = vsub.f32 %v61, %v36
    %v64 = vsub.f32 %v62, %v38
    %v65 = vmul.f32 %v59, 0.8992126
    %v66 = vmul.f32 %v60, 0.8992126
    %v67 = vmul.f32 %v63, 0.0007874016
    %v68 = vmul.f32 %v64, 0.0007874016
    %v69 = vadd.f32 %v65, %v67
    %v70 = vadd.f32 %v66, %v68
    %vm71 = vcmp.ne.s32.totalorder %v19, 0
    %vm72 = vcmp.ne.s32.totalorder %v20, 0
    %v73 = vsel %vm71, %v59, 0.0
    %v74 = vsel %vm72, %v60, 0.0
    %v75 = vsel %vm71, %v69, 0.0
    %v76 = vsel %vm72, %v70, 0.0
    %vm77 = vcmask 7168
    %v78 = vsel %vm77, %v75, 0.0
    %v79 = vsel %vm77, %v76, 0.0
    %v80 = vadd.f32 %v78, %v79
    %81 = vadd.xlane.f32.xlu0 %v80
    %v82 = vpop.xlane.xlu0 %81
    %v83 = vrot.slane %v82, 4
    %v84 = vadd.f32 %v82, %v83
    %v85 = vrot.slane %v84, 2
    %v86 = vadd.f32 %v84, %v85
    %v87 = vrot.slane %v86, 1
    %v88 = vadd.f32 %v86, %v87
    %s89 = vtos %v88
    %v90 = vsel %vm77, %v73, 0.0
    %v91 = vsel %vm77, %v74, 0.0
    %v92 = vadd.f32 %v90, %v91
    %93 = vadd.xlane.f32.xlu0 %v92
    %v94 = vpop.xlane.xlu0 %93
    %v95 = vrot.slane %v94, 4
    %v96 = vadd.f32 %v94, %v95
    %v97 = vrot.slane %v96, 2
    %v98 = vadd.f32 %v96, %v97
    %v99 = vrot.slane %v98, 1
    %v100 = vadd.f32 %v98, %v99
    %s101 = vtos %v100
    %v102 = vstv %s89
    %103 = vst [vmem:[#allocation2] sm:$0xff] %v102
    %v104 = vstv %s101
    %105 = vst [vmem:[#allocation4] sm:$0xff] %v104
    // Predicated region
    $region10: #{tpu_custom_call.1} parent=1 // pred_check
      _
    $region11: #{tpu_custom_call.1} parent=1 // pred_check_branch
      %107 = sbr.rel (0) target = $region13
    $region12: #{tpu_custom_call.1} parent=1 // pred_region
      %s109 = ssub.s32 128, 128
      %110 = vsyncadd [#allocation3], %s109
      %s112 = sshll.u32 [#allocation2], 4
      %s113 = int_to_ptr.vmem [resolvable:$true] %s112
      %115 = dma.vmem_to_hbm [thread:$0]  %s113, 128, %s2, [#allocation3]
    $region13: #{tpu_custom_call.1} parent=1 // pred_fallthru
      _
    // Predicated region
    $region14: #{tpu_custom_call.1} parent=1 // pred_check
      _
    $region15: #{tpu_custom_call.1} parent=1 // pred_check_branch
      %117 = sbr.rel (0) target = $region17
    $region16: #{tpu_custom_call.1} parent=1 // pred_region
      %s119 = ssub.s32 128, 128
      %120 = vsyncadd [#allocation5], %s119
      %s122 = sshll.u32 [#allocation4], 4
      %s123 = int_to_ptr.vmem [resolvable:$true] %s122
      %125 = dma.vmem_to_hbm [thread:$0]  %s123, 128, %s3, [#allocation5]
    $region17: #{tpu_custom_call.1} parent=1 // pred_fallthru
      _
    // Predicated region
    $region18: #{tpu_custom_call.1} parent=1 // pred_check
      _
    $region19: #{tpu_custom_call.1} parent=1 // pred_check_branch
      %127 = sbr.rel (0) target = $region21
    $region20: #{tpu_custom_call.1} parent=1 // pred_region
      %128 = dma.done [#allocation3], 128
    $region21: #{tpu_custom_call.1} parent=1 // pred_fallthru
      _
    // Predicated region
    $region22: #{tpu_custom_call.1} parent=1 // pred_check
      _
    $region23: #{tpu_custom_call.1} parent=1 // pred_check_branch
      %130 = sbr.rel (0) target = $region25
    $region24: #{tpu_custom_call.1} parent=1 // pred_region
      %131 = dma.done [#allocation5], 128
    $region25: #{tpu_custom_call.1} parent=1 // pred_fallthru
      _
    %132 = vsyncpa [#allocation3], 1
    %133 = vsyncpa [#allocation5], 1

</llo_original>
